<compile_context>
chip_gen: v6e
topology: v6e:2x2x1
jax: 0.10.0
libtpu: 0.0.40
codegen_flags: <defaults>
</compile_context>

<pallas_src>
import functools
from typing import Any, NamedTuple, Tuple

import jax
import jax.numpy as jnp
from jax.experimental import pallas as pl
from jax.experimental.pallas import tpu as pltpu


def _round_up(x, m):
    return ((x + m - 1) // m) * m


def _chip_traits():
    """Returns (mxu_m_granularity, vmem_limit_bytes_or_None, tensorcores/chip)."""
    try:
        kind = jax.devices()[0].device_kind.lower()
    except Exception:
        kind = ""
    if "v7" in kind:                                   # v7x: 2 TC, 64 MiB VMEM/TC
        return 256, 56 * 1024 * 1024, 2
    if "v6" in kind:                                   # v6e: 1 TC, 128 MiB VMEM
        return 256, 100 * 1024 * 1024, 1
    if "v5e" in kind or "v5 lite" in kind or "v5lite" in kind:
        return 128, 100 * 1024 * 1024, 1               # v5e: 1 TC, 128 MiB VMEM
    if "v5" in kind or "v4" in kind:                   # v5p / v4: megacore
        return 128, 100 * 1024 * 1024, 2
    return 128, None, 1                                # unknown: compiler defaults


# ---------------------------------------------------------------------------
# Kernel
# ---------------------------------------------------------------------------
def _mlp_fused_kernel(x_ref, *refs, num_layers, compute_dtype):
    # refs = (w0, b0, w1, b1, ..., w_{L-1}, b_{L-1}, o_ref)
    # x_ref: (TB, D0p) storage dtype, w_i: (D_i_p, D_{i+1}_p) storage dtype,
    # b_i: (1, D_{i+1}_p) f32, o_ref: (TB, D_L_p).  Feature dims padded to 128.
    o_ref = refs[-1]
    h = x_ref[...]
    for i in range(num_layers):
        w = refs[2 * i][...]            # already in compute (storage) dtype
        b = refs[2 * i + 1][...]        # f32
        # MXU matmul with f32 accumulation; bias-add / ReLU epilogue stays f32
        # and the activation is carried between layers in f32.
        y = jnp.dot(h.astype(compute_dtype), w, preferred_element_type=jnp.float32)
        y = y + b                       # (1, Out) broadcast over batch rows
        if i != num_layers - 1:
            y = jnp.maximum(y, 0.0)
        h = y
    o_ref[...] = h.astype(o_ref.dtype)


# ---------------------------------------------------------------------------
# Parameters
# ---------------------------------------------------------------------------
def init_mlp_params(key, input_dim, hidden_sizes):
    """Deterministic init matching torch.nn.Linear's U(-1/sqrt(in), 1/sqrt(in))."""
    dims = [input_dim] + list(hidden_sizes) + [1]
    params = []
    for i in range(len(dims) - 1):
        fan_in, fan_out = dims[i], dims[i + 1]
        key, kw, kb = jax.random.split(key, 3)
        bound = 1.0 / jnp.sqrt(jnp.float32(fan_in))
        # stored as (in, out)  (transpose of PyTorch's (out, in))
        w = jax.random.uniform(kw, (fan_in, fan_out), jnp.float32, -bound, bound)
        b = jax.random.uniform(kb, (1, fan_out), jnp.float32, -bound, bound)
        params.append((w, b))
    return params


class PreparedMLP(NamedTuple):
    dims: Tuple[int, ...]          # true feature dims  [D0, D1, ..., DL]
    pdims: Tuple[int, ...]         # 128-padded feature dims
    param_dtype: Any               # storage/compute dtype of x and weights
    flat_params: Tuple[jax.Array, ...]   # (w0, b0, w1, b1, ...)


def prepare_mlp_params(params, *, param_dtype=jnp.float32):
    """ONE-TIME padding + dtype conversion.  Do NOT call per forward step.

    Weights (and later the input x) are stored in `param_dtype` (f32 or bf16);
    biases stay f32 so the in-kernel epilogue is f32 on every chip generation.
    Padded rows/columns are exactly zero, so padding is numerically inert.
    """
    dims = [params[0][0].shape[0]] + [w.shape[1] for (w, _) in params]
    pdims = [_round_up(d, 128) for d in dims]
    flat = []
    for i, (w, b) in enumerate(params):
        w_p = jnp.zeros((pdims[i], pdims[i + 1]), param_dtype)
        w_p = w_p.at[: w.shape[0], : w.shape[1]].set(w.astype(param_dtype))
        b_p = jnp.zeros((1, pdims[i + 1]), jnp.float32)
        b_p = b_p.at[:, : b.shape[1]].set(b.astype(jnp.float32))
        flat += [w_p, b_p]
    return PreparedMLP(tuple(dims), tuple(pdims), param_dtype, tuple(flat))


# ---------------------------------------------------------------------------
# Forward
# ---------------------------------------------------------------------------
def mlp_forward(prepared: PreparedMLP, x, *, batch_tile=None, out_dtype=None):
    """Matches MLP.forward: [Linear, ReLU]*, final Linear (no ReLU) -> (B, 1).

    Single fused Pallas kernel over all layers; intermediate activations never
    leave VMEM/vregs.  Weights are resident (constant index_map) across the
    batch grid axis.
    """
    batch, input_dim = x.shape
    dims, pdims = prepared.dims, prepared.pdims
    num_layers = len(dims) - 1
    assert input_dim == dims[0], (input_dim, dims[0])
    param_dtype = prepared.param_dtype
    out_dtype = param_dtype if out_dtype is None else out_dtype

    m_gran, vmem_limit, n_cores = _chip_traits()

    # --- batch tile selection -------------------------------------------------
    if batch_tile is None:
        # Small hidden dims -> big batch tiles so per-step overhead never
        # dominates; large hidden dims -> smaller tiles to protect VMEM.
        maxd = max(pdims)
        batch_tile = 2048 if maxd <= 512 else (1024 if maxd <= 1024 else 256)

    if batch <= 8:
        tb = 8
    elif batch < m_gran:
        tb = _round_up(batch, 8)               # single full-array block
    else:
        tb = min(_round_up(batch, m_gran),
                 max(m_gran, (batch_tile // m_gran) * m_gran))
        # Megacore: guarantee >= n_cores grid steps so the "parallel" batch axis
        # actually shards across TensorCores (v7x / v4 / v5p).
        if n_cores > 1 and batch >= n_cores * m_gran:
            per_core = (batch + n_cores - 1) // n_cores
            tb = min(tb, _round_up(per_core, m_gran))
    pbatch = _round_up(batch, tb)
    grid = (pbatch // tb,)

    # --- input staging (cast + pad ONLY when necessary) -----------------------
    x_c = x if x.dtype == param_dtype else x.astype(param_dtype)
    if batch == pbatch and input_dim == pdims[0]:
        x_p = x_c
    else:
        x_p = jnp.zeros((pbatch, pdims[0]), param_dtype)
        x_p = x_p.at[:batch, :input_dim].set(x_c)

    flat = prepared.flat_params

    # TODO(synk): add a tiled (tm, tn, tk) K-pipeline fallback with an f32
    # accumulator for hidden sizes whose resident weights exceed ~48 MiB
    # (v7x has only 64 MiB VMEM per TensorCore); this path assumes all
    # padded weights fit in VMEM.

    def build(single_buffer_consts):
        const_kwargs = {}
        if single_buffer_consts:
            # Weights/biases have a constant index_map: single-buffer them so
            # the never-used second pipeline buffer doesn't eat VMEM.
            const_kwargs = dict(pipeline_mode=pl.Buffered(1))

        in_specs = [pl.BlockSpec((tb, pdims[0]), lambda i: (i, 0))]
        for li in range(num_layers):
            in_specs.append(pl.BlockSpec((pdims[li], pdims[li + 1]),
                                         lambda i: (0, 0), **const_kwargs))
            in_specs.append(pl.BlockSpec((1, pdims[li + 1]),
                                         lambda i: (0, 0), **const_kwargs))
        out_spec = pl.BlockSpec((tb, pdims[-1]), lambda i: (i, 0))

        p_bytes = jnp.dtype(param_dtype).itemsize
        o_bytes = jnp.dtype(out_dtype).itemsize
        flops = sum(2 * pbatch * pdims[i] * pdims[i + 1]
                    for i in range(num_layers))
        bytes_accessed = (
            pbatch * pdims[0] * p_bytes
            + sum(pdims[i] * pdims[i + 1] for i in range(num_layers)) * p_bytes
            + sum(pdims[i + 1] for i in range(num_layers)) * 4
            + pbatch * pdims[-1] * o_bytes
        )

        kernel = functools.partial(
            _mlp_fused_kernel, num_layers=num_layers, compute_dtype=param_dtype
        )
        return pl.pallas_call(
            kernel,
            out_shape=jax.ShapeDtypeStruct((pbatch, pdims[-1]), out_dtype),
            grid=grid,
            in_specs=in_specs,
            out_specs=out_spec,
            compiler_params=pltpu.CompilerParams(
                dimension_semantics=("parallel",),   # megacore-shardable batch
                vmem_limit_bytes=vmem_limit,
            ),
            cost_estimate=pl.CostEstimate(
                flops=flops, transcendentals=0, bytes_accessed=bytes_accessed
            ),
        )

    try:
        out_p = build(True)(x_p, *flat)
    except Exception:
        # pipeline_mode=pl.Buffered(1) unsupported on this jax/Mosaic build:
        # fall back to default double-buffering (identical results, more VMEM).
        out_p = build(False)(x_p, *flat)

    # Slice the real batch rows and the single true output column.
    return out_p[:batch, :1]


# ---------------------------------------------------------------------------
if __name__ == "__main__":
    key = jax.random.PRNGKey(0)

    batch = 8
    input_dim = 16
    hidden_sizes = [32, 32]

    k_params, k_x = jax.random.split(key)
    params = init_mlp_params(k_params, input_dim, hidden_sizes)
    x = jax.random.normal(k_x, (batch, input_dim), jnp.float32)

    # plain-JAX reference
    ref = x
    for i, (w, b) in enumerate(params):
        ref = ref @ w + b
        if i != len(params) - 1:
            ref = jnp.maximum(ref, 0.0)

    # --- f32 storage/compute path (default; exact) ---------------------------
    prepared_f32 = prepare_mlp_params(params, param_dtype=jnp.float32)  # one-time
    out = jax.block_until_ready(mlp_forward(prepared_f32, x))
    assert out.shape == (batch, 1), out.shape
    assert jnp.allclose(out, ref, atol=1e-4, rtol=1e-4), (
        jnp.max(jnp.abs(out - ref))
    )

    # --- bf16 weight/activation path (fast MXU path; f32 accumulate) ---------
    prepared_bf16 = prepare_mlp_params(params, param_dtype=jnp.bfloat16)
    out_bf16 = jax.block_until_ready(mlp_forward(prepared_bf16, x))
    assert out_bf16.shape == (batch, 1), out_bf16.shape
    assert jnp.allclose(out_bf16.astype(jnp.float32), ref, atol=5e-2, rtol=5e-2), (
        jnp.max(jnp.abs(out_bf16.astype(jnp.float32) - ref))
    )

    print("KERNEL_OK")
</pallas_src>

<mosaic_0001>
module attributes {stable_mosaic.version = 11 : i64} {
  func.func @_mlp_fused_kernel(%arg0: i32, %arg1: memref<8x128xf32, #tpu.memory_space<vmem>>, %arg2: memref<128x128xf32, #tpu.memory_space<vmem>>, %arg3: memref<1x128xf32, #tpu.memory_space<vmem>>, %arg4: memref<128x128xf32, #tpu.memory_space<vmem>>, %arg5: memref<1x128xf32, #tpu.memory_space<vmem>>, %arg6: memref<128x128xf32, #tpu.memory_space<vmem>>, %arg7: memref<1x128xf32, #tpu.memory_space<vmem>>, %arg8: memref<8x128xf32, #tpu.memory_space<vmem>>) attributes {dimension_semantics = [#tpu.dimension_semantics<parallel>], iteration_bounds = array<i64: 1>, scalar_prefetch = 0 : i64, scratch_operands = 0 : i64, tpu.core_type = #tpu.core_type<tc>, window_params = [{transform_indices = @transform_0, window_bounds = array<i64: 8, 128>}, {pipeline_mode = #tpu.pipeline_mode<synchronous>, transform_indices = @transform_1, window_bounds = array<i64: 128, 128>}, {pipeline_mode = #tpu.pipeline_mode<synchronous>, transform_indices = @transform_2, window_bounds = array<i64: 1, 128>}, {pipeline_mode = #tpu.pipeline_mode<synchronous>, transform_indices = @transform_3, window_bounds = array<i64: 128, 128>}, {pipeline_mode = #tpu.pipeline_mode<synchronous>, transform_indices = @transform_4, window_bounds = array<i64: 1, 128>}, {pipeline_mode = #tpu.pipeline_mode<synchronous>, transform_indices = @transform_5, window_bounds = array<i64: 128, 128>}, {pipeline_mode = #tpu.pipeline_mode<synchronous>, transform_indices = @transform_6, window_bounds = array<i64: 1, 128>}, {transform_indices = @transform_7, window_bounds = array<i64: 8, 128>}]} {
    %c0 = arith.constant 0 : index
    %c0_0 = arith.constant 0 : index
    %0 = vector.load %arg1[%c0, %c0_0] : memref<8x128xf32, #tpu.memory_space<vmem>>, vector<8x128xf32>
    %c0_1 = arith.constant 0 : index
    %c0_2 = arith.constant 0 : index
    %1 = vector.load %arg2[%c0_1, %c0_2] : memref<128x128xf32, #tpu.memory_space<vmem>>, vector<128x128xf32>
    %c0_3 = arith.constant 0 : index
    %c0_4 = arith.constant 0 : index
    %2 = vector.load %arg3[%c0_3, %c0_4] : memref<1x128xf32, #tpu.memory_space<vmem>>, vector<1x128xf32>
    %cst = arith.constant dense<0.000000e+00> : vector<8x128xf32>
    %3 = tpu.matmul %0, %1, %cst {dimension_numbers = #tpu.dot_dimension_numbers<[1], [0], [0], [1], [0, 0, 1, 1], [], []>} : vector<8x128xf32>, vector<128x128xf32>, vector<8x128xf32> -> vector<8x128xf32>
    %4 = vector.broadcast %2 : vector<1x128xf32> to vector<8x128xf32>
    %5 = arith.addf %3, %4 : vector<8x128xf32>
    %cst_5 = arith.constant 0.000000e+00 : f32
    %6 = vector.broadcast %cst_5 : f32 to vector<8x128xf32>
    %7 = arith.maximumf %5, %6 : vector<8x128xf32>
    %c0_6 = arith.constant 0 : index
    %c0_7 = arith.constant 0 : index
    %8 = vector.load %arg4[%c0_6, %c0_7] : memref<128x128xf32, #tpu.memory_space<vmem>>, vector<128x128xf32>
    %c0_8 = arith.constant 0 : index
    %c0_9 = arith.constant 0 : index
    %9 = vector.load %arg5[%c0_8, %c0_9] : memref<1x128xf32, #tpu.memory_space<vmem>>, vector<1x128xf32>
    %cst_10 = arith.constant dense<0.000000e+00> : vector<8x128xf32>
    %10 = tpu.matmul %7, %8, %cst_10 {dimension_numbers = #tpu.dot_dimension_numbers<[1], [0], [0], [1], [0, 0, 1, 1], [], []>} : vector<8x128xf32>, vector<128x128xf32>, vector<8x128xf32> -> vector<8x128xf32>
    %11 = vector.broadcast %9 : vector<1x128xf32> to vector<8x128xf32>
    %12 = arith.addf %10, %11 : vector<8x128xf32>
    %cst_11 = arith.constant 0.000000e+00 : f32
    %13 = vector.broadcast %cst_11 : f32 to vector<8x128xf32>
    %14 = arith.maximumf %12, %13 : vector<8x128xf32>
    %c0_12 = arith.constant 0 : index
    %c0_13 = arith.constant 0 : index
    %15 = vector.load %arg6[%c0_12, %c0_13] : memref<128x128xf32, #tpu.memory_space<vmem>>, vector<128x128xf32>
    %c0_14 = arith.constant 0 : index
    %c0_15 = arith.constant 0 : index
    %16 = vector.load %arg7[%c0_14, %c0_15] : memref<1x128xf32, #tpu.memory_space<vmem>>, vector<1x128xf32>
    %cst_16 = arith.constant dense<0.000000e+00> : vector<8x128xf32>
    %17 = tpu.matmul %14, %15, %cst_16 {dimension_numbers = #tpu.dot_dimension_numbers<[1], [0], [0], [1], [0, 0, 1, 1], [], []>} : vector<8x128xf32>, vector<128x128xf32>, vector<8x128xf32> -> vector<8x128xf32>
    %18 = vector.broadcast %16 : vector<1x128xf32> to vector<8x128xf32>
    %19 = arith.addf %17, %18 : vector<8x128xf32>
    %c0_17 = arith.constant 0 : index
    %c0_18 = arith.constant 0 : index
    %20 = vector.load %arg8[%c0_17, %c0_18] : memref<8x128xf32, #tpu.memory_space<vmem>>, vector<8x128xf32>
    tpu.vector_store %arg8[%c0_17, %c0_18], %19 {strides = array<i32>} : memref<8x128xf32, #tpu.memory_space<vmem>>, vector<8x128xf32>,
    return
  }
  func.func @transform_0(%arg0: i32) -> (i32, i32) {
    %c0_i32 = arith.constant 0 : i32
    %c0_i32_0 = arith.constant 0 : i32
    return %arg0, %c0_i32 : i32, i32
  }
  func.func @transform_1(%arg0: i32) -> (i32, i32) {
    %c0_i32 = arith.constant 0 : i32
    %c0_i32_0 = arith.constant 0 : i32
    %c0_i32_1 = arith.constant 0 : i32
    return %c0_i32, %c0_i32_0 : i32, i32
  }
  func.func @transform_2(%arg0: i32) -> (i32, i32) {
    %c0_i32 = arith.constant 0 : i32
    %c0_i32_0 = arith.constant 0 : i32
    %c0_i32_1 = arith.constant 0 : i32
    return %c0_i32, %c0_i32_0 : i32, i32
  }
  func.func @transform_3(%arg0: i32) -> (i32, i32) {
    %c0_i32 = arith.constant 0 : i32
    %c0_i32_0 = arith.constant 0 : i32
    %c0_i32_1 = arith.constant 0 : i32
    return %c0_i32, %c0_i32_0 : i32, i32
  }
  func.func @transform_4(%arg0: i32) -> (i32, i32) {
    %c0_i32 = arith.constant 0 : i32
    %c0_i32_0 = arith.constant 0 : i32
    %c0_i32_1 = arith.constant 0 : i32
    return %c0_i32, %c0_i32_0 : i32, i32
  }
  func.func @transform_5(%arg0: i32) -> (i32, i32) {
    %c0_i32 = arith.constant 0 : i32
    %c0_i32_0 = arith.constant 0 : i32
    %c0_i32_1 = arith.constant 0 : i32
    return %c0_i32, %c0_i32_0 : i32, i32
  }
  func.func @transform_6(%arg0: i32) -> (i32, i32) {
    %c0_i32 = arith.constant 0 : i32
    %c0_i32_0 = arith.constant 0 : i32
    %c0_i32_1 = arith.constant 0 : i32
    return %c0_i32, %c0_i32_0 : i32, i32
  }
  func.func @transform_7(%arg0: i32) -> (i32, i32) {
    %c0_i32 = arith.constant 0 : i32
    %c0_i32_0 = arith.constant 0 : i32
    return %arg0, %c0_i32 : i32, i32
  }
}

module attributes {stable_mosaic.version = 11 : i64} {
  func.func @_mlp_fused_kernel(%arg0: i32, %arg1: memref<8x128xf32, #tpu.memory_space<vmem>>, %arg2: memref<128x128xf32, #tpu.memory_space<vmem>>, %arg3: memref<1x128xf32, #tpu.memory_space<vmem>>, %arg4: memref<128x128xf32, #tpu.memory_space<vmem>>, %arg5: memref<1x128xf32, #tpu.memory_space<vmem>>, %arg6: memref<128x128xf32, #tpu.memory_space<vmem>>, %arg7: memref<1x128xf32, #tpu.memory_space<vmem>>, %arg8: memref<8x128xf32, #tpu.memory_space<vmem>>) attributes {dimension_semantics = [#tpu.dimension_semantics<parallel>], iteration_bounds = array<i64: 1>, scalar_prefetch = 0 : i64, scratch_operands = 0 : i64, tpu.core_type = #tpu.core_type<tc>, window_params = [{transform_indices = @transform_0, window_bounds = array<i64: 8, 128>}, {pipeline_mode = #tpu.pipeline_mode<synchronous>, transform_indices = @transform_1, window_bounds = array<i64: 128, 128>}, {pipeline_mode = #tpu.pipeline_mode<synchronous>, transform_indices = @transform_2, window_bounds = array<i64: 1, 128>}, {pipeline_mode = #tpu.pipeline_mode<synchronous>, transform_indices = @transform_3, window_bounds = array<i64: 128, 128>}, {pipeline_mode = #tpu.pipeline_mode<synchronous>, transform_indices = @transform_4, window_bounds = array<i64: 1, 128>}, {pipeline_mode = #tpu.pipeline_mode<synchronous>, transform_indices = @transform_5, window_bounds = array<i64: 128, 128>}, {pipeline_mode = #tpu.pipeline_mode<synchronous>, transform_indices = @transform_6, window_bounds = array<i64: 1, 128>}, {transform_indices = @transform_7, window_bounds = array<i64: 8, 128>}]} {
    %c0 = arith.constant 0 : index
    %c0_0 = arith.constant 0 : index
    %0 = vector.load %arg1[%c0, %c0_0] : memref<8x128xf32, #tpu.memory_space<vmem>>, vector<8x128xf32>
    %c0_1 = arith.constant 0 : index
    %c0_2 = arith.constant 0 : index
    %1 = vector.load %arg2[%c0_1, %c0_2] : memref<128x128xf32, #tpu.memory_space<vmem>>, vector<128x128xf32>
    %c0_3 = arith.constant 0 : index
    %c0_4 = arith.constant 0 : index
    %2 = vector.load %arg3[%c0_3, %c0_4] : memref<1x128xf32, #tpu.memory_space<vmem>>, vector<1x128xf32>
    %cst = arith.constant dense<0.000000e+00> : vector<8x128xf32>
    %3 = tpu.matmul %0, %1, %cst {dimension_numbers = #tpu.dot_dimension_numbers<[1], [0], [0], [1], [0, 0, 1, 1], [], []>} : vector<8x128xf32>, vector<128x128xf32>, vector<8x128xf32> -> vector<8x128xf32>
    %4 = vector.broadcast %2 : vector<1x128xf32> to vector<8x128xf32>
    %5 = arith.addf %3, %4 : vector<8x128xf32>
    %cst_5 = arith.constant 0.000000e+00 : f32
    %6 = vector.broadcast %cst_5 : f32 to vector<8x128xf32>
    %7 = arith.maximumf %5, %6 : vector<8x128xf32>
    %c0_6 = arith.constant 0 : index
    %c0_7 = arith.constant 0 : index
    %8 = vector.load %arg4[%c0_6, %c0_7] : memref<128x128xf32, #tpu.memory_space<vmem>>, vector<128x128xf32>
    %c0_8 = arith.constant 0 : index
    %c0_9 = arith.constant 0 : index
    %9 = vector.load %arg5[%c0_8, %c0_9] : memref<1x128xf32, #tpu.memory_space<vmem>>, vector<1x128xf32>
    %cst_10 = arith.constant dense<0.000000e+00> : vector<8x128xf32>
    %10 = tpu.matmul %7, %8, %cst_10 {dimension_numbers = #tpu.dot_dimension_numbers<[1], [0], [0], [1], [0, 0, 1, 1], [], []>} : vector<8x128xf32>, vector<128x128xf32>, vector<8x128xf32> -> vector<8x128xf32>
    %11 = vector.broadcast %9 : vector<1x128xf32> to vector<8x128xf32>
    %12 = arith.addf %10, %11 : vector<8x128xf32>
    %cst_11 = arith.constant 0.000000e+00 : f32
    %13 = vector.broadcast %cst_11 : f32 to vector<8x128xf32>
    %14 = arith.maximumf %12, %13 : vector<8x128xf32>
    %c0_12 = arith.constant 0 : index
    %c0_13 = arith.constant 0 : index
    %15 = vector.load %arg6[%c0_12, %c0_13] : memref<128x128xf32, #tpu.memory_space<vmem>>, vector<128x128xf32>
    %c0_14 = arith.constant 0 : index
    %c0_15 = arith.constant 0 : index
    %16 = vector.load %arg7[%c0_14, %c0_15] : memref<1x128xf32, #tpu.memory_space<vmem>>, vector<1x128xf32>
    %cst_16 = arith.constant dense<0.000000e+00> : vector<8x128xf32>
    %17 = tpu.matmul %14, %15, %cst_16 {dimension_numbers = #tpu.dot_dimension_numbers<[1], [0], [0], [1], [0, 0, 1, 1], [], []>} : vector<8x128xf32>, vector<128x128xf32>, vector<8x128xf32> -> vector<8x128xf32>
    %18 = vector.broadcast %16 : vector<1x128xf32> to vector<8x128xf32>
    %19 = arith.addf %17, %18 : vector<8x128xf32>
    %c0_17 = arith.constant 0 : index
    %c0_18 = arith.constant 0 : index
    %20 = vector.load %arg8[%c0_17, %c0_18] : memref<8x128xf32, #tpu.memory_space<vmem>>, vector<8x128xf32>
    tpu.vector_store %arg8[%c0_17, %c0_18], %19 {strides = array<i32>} : memref<8x128xf32, #tpu.memory_space<vmem>>, vector<8x128xf32>,
    return
  }
  func.func @transform_0(%arg0: i32) -> (i32, i32) {
    %c0_i32 = arith.constant 0 : i32
    %c0_i32_0 = arith.constant 0 : i32
    return %arg0, %c0_i32 : i32, i32
  }
  func.func @transform_1(%arg0: i32) -> (i32, i32) {
    %c0_i32 = arith.constant 0 : i32
    %c0_i32_0 = arith.constant 0 : i32
    %c0_i32_1 = arith.constant 0 : i32
    return %c0_i32, %c0_i32_0 : i32, i32
  }
  func.func @transform_2(%arg0: i32) -> (i32, i32) {
    %c0_i32 = arith.constant 0 : i32
    %c0_i32_0 = arith.constant 0 : i32
    %c0_i32_1 = arith.constant 0 : i32
    return %c0_i32, %c0_i32_0 : i32, i32
  }
  func.func @transform_3(%arg0: i32) -> (i32, i32) {
    %c0_i32 = arith.constant 0 : i32
    %c0_i32_0 = arith.constant 0 : i32
    %c0_i32_1 = arith.constant 0 : i32
    return %c0_i32, %c0_i32_0 : i32, i32
  }
  func.func @transform_4(%arg0: i32) -> (i32, i32) {
    %c0_i32 = arith.constant 0 : i32
    %c0_i32_0 = arith.constant 0 : i32
    %c0_i32_1 = arith.constant 0 : i32
    return %c0_i32, %c0_i32_0 : i32, i32
  }
  func.func @transform_5(%arg0: i32) -> (i32, i32) {
    %c0_i32 = arith.constant 0 : i32
    %c0_i32_0 = arith.constant 0 : i32
    %c0_i32_1 = arith.constant 0 : i32
    return %c0_i32, %c0_i32_0 : i32, i32
  }
  func.func @transform_6(%arg0: i32) -> (i32, i32) {
    %c0_i32 = arith.constant 0 : i32
    %c0_i32_0 = arith.constant 0 : i32
    %c0_i32_1 = arith.constant 0 : i32
    return %c0_i32, %c0_i32_0 : i32, i32
  }
  func.func @transform_7(%arg0: i32) -> (i32, i32) {
    %c0_i32 = arith.constant 0 : i32
    %c0_i32_0 = arith.constant 0 : i32
    return %arg0, %c0_i32 : i32, i32
  }
}

</mosaic_0001>

<llo_original>
// kernel: tpu_custom_call.1
$region0: #{tpu_custom_call.1}
  #allocation0 [shape = 'u32[]', space=smem, size = 0x4, offset = 0x4, fixed_abs, tag = 'smem constant byte address 0x4 - core index']
  #allocation1 [shape = 'u32[144,128]{1,0:T(1,128)}', space=vmem, size = 0x12000, scoped, tag = 'internal scratch']
  %s0 = inlined_call_operand.hbm [shape: f32[8,128], index: 0, kind: input, shape index: {}]
  %s1 = inlined_call_operand.hbm [shape: f32[128,128], index: 1, kind: input, shape index: {}]
  %s2 = inlined_call_operand.vmem [shape: f32[1,128], index: 2, kind: input, shape index: {}]
  %s3 = inlined_call_operand.hbm [shape: f32[128,128], index: 3, kind: input, shape index: {}]
  %s4 = inlined_call_operand.vmem [shape: f32[1,128], index: 4, kind: input, shape index: {}]
  %s5 = inlined_call_operand.hbm [shape: f32[128,128], index: 5, kind: input, shape index: {}]
  %s6 = inlined_call_operand.vmem [shape: f32[1,128], index: 6, kind: input, shape index: {}]
  %s7 = inlined_call_operand.hbm [shape: f32[8,128], index: 7, kind: output, shape index: {}]
  %s8 = sld [smem:[#allocation0]]
  $region54: #{tpu_custom_call.1} parent=0
    _
  %s10 = ssub.s32 1, %s8
  %s11 = scalar_select 0, %s10, %s8
  $region1: #{tpu_custom_call.1} parent=0
    #allocation2 [shape = 'u8[4096]{0}', space=vmem, size = 0x1000, scoped, tag = 'input window, operand 0, single buffered']
    #allocation3 [shape = 's32[1]{0}', space=sflag, size = 0x4, scoped, tag = 'scoped memory for tpu_custom_call.1']
    #allocation4 [shape = 's32[1]{0}', space=sflag, size = 0x4, scoped, tag = 'scoped memory for tpu_custom_call.1']
    #allocation5 [shape = 'u8[65536]{0}', space=vmem, size = 0x10000, scoped, tag = 'input window, operand 1, single buffered']
    #allocation6 [shape = 's32[1]{0}', space=sflag, size = 0x4, scoped, tag = 'scoped memory for tpu_custom_call.1']
    #allocation7 [shape = 'u8[65536]{0}', space=vmem, size = 0x10000, scoped, tag = 'input window, operand 3, single buffered']
    #allocation8 [shape = 'u8[65536]{0}', space=vmem, size = 0x10000, scoped, tag = 'input window, operand 5, single buffered']
    #allocation9 [shape = 's32[1]{0}', space=sflag, size = 0x4, scoped, tag = 'scoped memory for tpu_custom_call.1']
    #allocation10 [shape = 'u8[4096]{0}', space=vmem, size = 0x1000, scoped, tag = 'output window, operand 0, single buffered']
    %12 = vsyncpa [#allocation3], 0
    %13 = vsyncpa [#allocation6], 0
    %14 = vsyncpa [#allocation9], 0
    %15 = vsyncpa [#allocation4], 0
    // Predicated region
    $region2: #{tpu_custom_call.1} parent=1 // pred_check
      _
    $region3: #{tpu_custom_call.1} parent=1 // pred_check_branch
      %17 = sbr.rel (0) target = $region5
    $region4: #{tpu_custom_call.1} parent=1 // pred_region
      %s19 = ssub.s32 128, 128
      %20 = vsyncadd [#allocation3], %s19
      %s22 = sshll.u32 [#allocation2], 4
      %s23 = int_to_ptr.vmem [resolvable:$true] %s22
      %25 = dma.hbm_to_vmem [thread:$0]  %s0, 128, %s23, [#allocation3]
    $region5: #{tpu_custom_call.1} parent=1 // pred_fallthru
      _
    // Predicated region
    $region6: #{tpu_custom_call.1} parent=1 // pred_check
      _
    $region7: #{tpu_custom_call.1} parent=1 // pred_check_branch
      %27 = sbr.rel (0) target = $region9
    $region8: #{tpu_custom_call.1} parent=1 // pred_region
      %s29 = ssub.s32 2048, 2048
      %30 = vsyncadd [#allocation6], %s29
      %s31 = sshll.u32 [#allocation5], 4
      %s32 = int_to_ptr.vmem [resolvable:$true] %s31
      %37 = dma.hbm_to_vmem [thread:$0]  %s1, 2048, %s32, [#allocation6], 128, 128, 8
    $region9: #{tpu_custom_call.1} parent=1 // pred_fallthru
      _
    // Predicated region
    $region10: #{tpu_custom_call.1} parent=1 // pred_check
      _
    $region11: #{tpu_custom_call.1} parent=1 // pred_check_branch
      %39 = sbr.rel (0) target = $region13
    $region12: #{tpu_custom_call.1} parent=1 // pred_region
      _
    $region13: #{tpu_custom_call.1} parent=1 // pred_fallthru
      _
    // Predicated region
    $region14: #{tpu_custom_call.1} parent=1 // pred_check
      _
    $region15: #{tpu_custom_call.1} parent=1 // pred_check_branch
      %41 = sbr.rel (0) target = $region17
    $region16: #{tpu_custom_call.1} parent=1 // pred_region
      %s43 = ssub.s32 2048, 2048
      %44 = vsyncadd [#allocation6], %s43
      %s45 = sshll.u32 [#allocation7], 4
      %s46 = int_to_ptr.vmem [resolvable:$true] %s45
      %51 = dma.hbm_to_vmem [thread:$0]  %s3, 2048, %s46, [#allocation6], 128, 128, 8
    $region17: #{tpu_custom_call.1} parent=1 // pred_fallthru
      _
    // Predicated region
    $region18: #{tpu_custom_call.1} parent=1 // pred_check
      _
    $region19: #{tpu_custom_call.1} parent=1 // pred_check_branch
      %53 = sbr.rel (0) target = $region21
    $region20: #{tpu_custom_call.1} parent=1 // pred_region
      _
    $region21: #{tpu_custom_call.1} parent=1 // pred_fallthru
      _
    // Predicated region
    $region22: #{tpu_custom_call.1} parent=1 // pred_check
      _
    $region23: #{tpu_custom_call.1} parent=1 // pred_check_branch
      %55 = sbr.rel (0) target = $region25
    $region24: #{tpu_custom_call.1} parent=1 // pred_region
      %s57 = ssub.s32 2048, 2048
      %58 = vsyncadd [#allocation9], %s57
      %s59 = sshll.u32 [#allocation8], 4
      %s60 = int_to_ptr.vmem [resolvable:$true] %s59
      %65 = dma.hbm_to_vmem [thread:$0]  %s5, 2048, %s60, [#allocation9], 128, 128, 8
    $region25: #{tpu_custom_call.1} parent=1 // pred_fallthru
      _
    // Predicated region
    $region26: #{tpu_custom_call.1} parent=1 // pred_check
      _
    $region27: #{tpu_custom_call.1} parent=1 // pred_check_branch
      %67 = sbr.rel (0) target = $region29
    $region28: #{tpu_custom_call.1} parent=1 // pred_region
      _
    $region29: #{tpu_custom_call.1} parent=1 // pred_fallthru
      _
    // Predicated region
    $region30: #{tpu_custom_call.1} parent=1 // pred_check
      _
    $region31: #{tpu_custom_call.1} parent=1 // pred_check_branch
      %69 = sbr.rel (0) target = $region33
    $region32: #{tpu_custom_call.1} parent=1 // pred_region
      %70 = dma.done [#allocation3], 128
    $region33: #{tpu_custom_call.1} parent=1 // pred_fallthru
      _
    // Predicated region
    $region34: #{tpu_custom_call.1} parent=1 // pred_check
      _
    $region35: #{tpu_custom_call.1} parent=1 // pred_check_branch
      %72 = sbr.rel (0) target = $region37
    $region36: #{tpu_custom_call.1} parent=1 // pred_region
      %73 = dma.done [#allocation6], 2048
    $region37: #{tpu_custom_call.1} parent=1 // pred_fallthru
      _
    // Predicated region
    $region38: #{tpu_custom_call.1} parent=1 // pred_check
      _
    $region39: #{tpu_custom_call.1} parent=1 // pred_check_branch
      %75 = sbr.rel (0) target = $region41
    $region40: #{tpu_custom_call.1} parent=1 // pred_region
      %76 = dma.done [#allocation6], 2048
    $region41: #{tpu_custom_call.1} parent=1 // pred_fallthru
      _
    // Predicated region
    $region42: #{tpu_custom_call.1} parent=1 // pred_check
      _
    $region43: #{tpu_custom_call.1} parent=1 // pred_check_branch
      %78 = sbr.rel (0) target = $region45
    $region44: #{tpu_custom_call.1} parent=1 // pred_region
      %79 = dma.done [#allocation9], 2048
    $region45: #{tpu_custom_call.1} parent=1 // pred_fallthru
      _
    %v80 = vld [vmem:[#allocation2] sm:$0xff]
    %v81 = vld [vmem:[#allocation5] sm:$0xff]
    %v82 = vld [vmem:[#allocation5 + $0x8] sm:$0xff]
    %v83 = vld [vmem:[#allocation5 + $0x10] sm:$0xff]
    %v84 = vld [vmem:[#allocation5 + $0x18] sm:$0xff]
    %v85 = vld [vmem:[#allocation5 + $0x20] sm:$0xff]
    %v86 = vld [vmem:[#allocation5 + $0x28] sm:$0xff]
    %v87 = vld [vmem:[#allocation5 + $0x30] sm:$0xff]
    %v88 = vld [vmem:[#allocation5 + $0x38] sm:$0xff]
    %v89 = vld [vmem:[#allocation5 + $0x40] sm:$0xff]
    %v90 = vld [vmem:[#allocation5 + $0x48] sm:$0xff]
    %v91 = vld [vmem:[#allocation5 + $0x50] sm:$0xff]
    %v92 = vld [vmem:[#allocation5 + $0x58] sm:$0xff]
    %v93 = vld [vmem:[#allocation5 + $0x60] sm:$0xff]
    %v94 = vld [vmem:[#allocation5 + $0x68] sm:$0xff]
    %v95 = vld [vmem:[#allocation5 + $0x70] sm:$0xff]
    %v96 = vld [vmem:[#allocation5 + $0x78] sm:$0xff]
    %v97 = vld [vmem:[%s2] sm:$0x1]
    %v99 = vlaneseq
    %v100 = vshrl.u32 %v99, 7
    %v101 = vsub.s32 0, %v100
    %v102 = vrot.slane %v97, %v101
    %104 = vmatprep.subr.mxu0 0.0
    %105 = vmatpush1.msra.mxu0 %v96
    %106 = vmatprep.subr.mxu0 0.0
    %107 = vmatpush1.msra.mxu0 %v95
    %108 = vmatprep.subr.mxu0 0.0
    %109 = vmatpush1.msra.mxu0 %v94
    %110 = vmatprep.subr.mxu0 0.0
    %111 = vmatpush1.msra.mxu0 %v93
    %112 = vmatprep.subr.mxu0 0.0
    %113 = vmatpush1.msra.mxu0 %v92
    %114 = vmatprep.subr.mxu0 0.0
    %115 = vmatpush1.msra.mxu0 %v91
    %116 = vmatprep.subr.mxu0 0.0
    %117 = vmatpush1.msra.mxu0 %v90
    %118 = vmatprep.subr.mxu0 0.0
    %119 = vmatpush1.msra.mxu0 %v89
    %120 = vmatprep.subr.mxu0 0.0
    %121 = vmatpush1.msra.mxu0 %v88
    %122 = vmatprep.subr.mxu0 0.0
    %123 = vmatpush1.msra.mxu0 %v87
    %124 = vmatprep.subr.mxu0 0.0
    %125 = vmatpush1.msra.mxu0 %v86
    %126 = vmatprep.subr.mxu0 0.0
    %127 = vmatpush1.msra.mxu0 %v85
    %128 = vmatprep.subr.mxu0 0.0
    %129 = vmatpush1.msra.mxu0 %v84
    %130 = vmatprep.subr.mxu0 0.0
    %131 = vmatpush1.msra.mxu0 %v83
    %132 = vmatprep.subr.mxu0 0.0
    %133 = vmatpush1.msra.mxu0 %v82
    %134 = vmatprep.subr.mxu0 0.0
    %135 = vmatpush1.msra.mxu0 %v81
    %136 = vmatprep.subr.mxu0 0.0
    %137 = vmatpush2.msra.mxu0 0.0
    %138 = vmatprep.subr.mxu0 0.0
    %139 = vmatpush2.msra.mxu0 0.0
    %140 = vmatprep.subr.mxu0 0.0
    %141 = vmatpush2.msra.mxu0 0.0
    %142 = vmatprep.subr.mxu0 0.0
    %143 = vmatpush2.msra.mxu0 0.0
    %144 = vmatprep.subr.mxu0 0.0
    %145 = vmatpush2.msra.mxu0 0.0
    %146 = vmatprep.subr.mxu0 0.0
    %147 = vmatpush2.msra.mxu0 0.0
    %148 = vmatprep.subr.mxu0 0.0
    %149 = vmatpush2.msra.mxu0 0.0
    %150 = vmatprep.subr.mxu0 0.0
    %151 = vmatpush2.msra.mxu0 0.0
    %152 = vmatprep.subr.mxu0 0.0
    %153 = vmatpush2.msra.mxu0 0.0
    %154 = vmatprep.subr.mxu0 0.0
    %155 = vmatpush2.msra.mxu0 0.0
    %156 = vmatprep.subr.mxu0 0.0
    %157 = vmatpush2.msra.mxu0 0.0
    %158 = vmatprep.subr.mxu0 0.0
    %159 = vmatpush2.msra.mxu0 0.0
    %160 = vmatprep.subr.mxu0 0.0
    %161 = vmatpush2.msra.mxu0 0.0
    %162 = vmatprep.subr.mxu0 0.0
    %163 = vmatpush2.msra.mxu0 0.0
    %164 = vmatprep.subr.mxu0 0.0
    %165 = vmatpush2.msra.mxu0 0.0
    %166 = vmatprep.subr.mxu0 0.0
    %167 = vmatpush2.msra.mxu0 0.0
    %168 = vmatprep.mubr.f32.mxu0 0.0
    %169 = vmatmul.mubr.f32.gmra.mxu0 %v80
    %v170 = vpop.f32.mrf.mxu0
    %v171 = vadd.f32 %v102, %v170
    %v172 = vpop.f32.mrf.mxu0
    %173 = vdwg.mxu0
    %v174 = vmax.f32 %v171, 0.0
    %v175 = vld [vmem:[#allocation7] sm:$0xff]
    %v176 = vld [vmem:[#allocation7 + $0x8] sm:$0xff]
    %v177 = vld [vmem:[#allocation7 + $0x10] sm:$0xff]
    %v178 = vld [vmem:[#allocation7 + $0x18] sm:$0xff]
    %v179 = vld [vmem:[#allocation7 + $0x20] sm:$0xff]
    %v180 = vld [vmem:[#allocation7 + $0x28] sm:$0xff]
    %v181 = vld [vmem:[#allocation7 + $0x30] sm:$0xff]
    %v182 = vld [vmem:[#allocation7 + $0x38] sm:$0xff]
    %v183 = vld [vmem:[#allocation7 + $0x40] sm:$0xff]
    %v184 = vld [vmem:[#allocation7 + $0x48] sm:$0xff]
    %v185 = vld [vmem:[#allocation7 + $0x50] sm:$0xff]
    %v186 = vld [vmem:[#allocation7 + $0x58] sm:$0xff]
    %v187 = vld [vmem:[#allocation7 + $0x60] sm:$0xff]
    %v188 = vld [vmem:[#allocation7 + $0x68] sm:$0xff]
    %v189 = vld [vmem:[#allocation7 + $0x70] sm:$0xff]
    %v190 = vld [vmem:[#allocation7 + $0x78] sm:$0xff]
    %v191 = vld [vmem:[%s4] sm:$0x1]
    %v193 = vlaneseq
    %v194 = vshrl.u32 %v193, 7
    %v195 = vsub.s32 0, %v194
    %v196 = vrot.slane %v191, %v195
    %198 = vmatprep.subr.mxu0 0.0
    %199 = vmatpush1.msra.mxu0 %v190
    %200 = vmatprep.subr.mxu0 0.0
    %201 = vmatpush1.msra.mxu0 %v189
    %202 = vmatprep.subr.mxu0 0.0
    %203 = vmatpush1.msra.mxu0 %v188
    %204 = vmatprep.subr.mxu0 0.0
    %205 = vmatpush1.msra.mxu0 %v187
    %206 = vmatprep.subr.mxu0 0.0
    %207 = vmatpush1.msra.mxu0 %v186
    %208 = vmatprep.subr.mxu0 0.0
    %209 = vmatpush1.msra.mxu0 %v185
    %210 = vmatprep.subr.mxu0 0.0
    %211 = vmatpush1.msra.mxu0 %v184
    %212 = vmatprep.subr.mxu0 0.0
    %213 = vmatpush1.msra.mxu0 %v183
    %214 = vmatprep.subr.mxu0 0.0
    %215 = vmatpush1.msra.mxu0 %v182
    %216 = vmatprep.subr.mxu0 0.0
    %217 = vmatpush1.msra.mxu0 %v181
    %218 = vmatprep.subr.mxu0 0.0
    %219 = vmatpush1.msra.mxu0 %v180
    %220 = vmatprep.subr.mxu0 0.0
    %221 = vmatpush1.msra.mxu0 %v179
    %222 = vmatprep.subr.mxu0 0.0
    %223 = vmatpush1.msra.mxu0 %v178
    %224 = vmatprep.subr.mxu0 0.0
    %225 = vmatpush1.msra.mxu0 %v177
    %226 = vmatprep.subr.mxu0 0.0
    %227 = vmatpush1.msra.mxu0 %v176
    %228 = vmatprep.subr.mxu0 0.0
    %229 = vmatpush1.msra.mxu0 %v175
    %230 = vmatprep.subr.mxu0 0.0
    %231 = vmatpush2.msra.mxu0 0.0
    %232 = vmatprep.subr.mxu0 0.0
    %233 = vmatpush2.msra.mxu0 0.0
    %234 = vmatprep.subr.mxu0 0.0
    %235 = vmatpush2.msra.mxu0 0.0
    %236 = vmatprep.subr.mxu0 0.0
    %237 = vmatpush2.msra.mxu0 0.0
    %238 = vmatprep.subr.mxu0 0.0
    %239 = vmatpush2.msra.mxu0 0.0
    %240 = vmatprep.subr.mxu0 0.0
    %241 = vmatpush2.msra.mxu0 0.0
    %242 = vmatprep.subr.mxu0 0.0
    %243 = vmatpush2.msra.mxu0 0.0
    %244 = vmatprep.subr.mxu0 0.0
    %245 = vmatpush2.msra.mxu0 0.0
    %246 = vmatprep.subr.mxu0 0.0
    %247 = vmatpush2.msra.mxu0 0.0
    %248 = vmatprep.subr.mxu0 0.0
    %249 = vmatpush2.msra.mxu0 0.0
    %250 = vmatprep.subr.mxu0 0.0
    %251 = vmatpush2.msra.mxu0 0.0
    %252 = vmatprep.subr.mxu0 0.0
    %253 = vmatpush2.msra.mxu0 0.0
    %254 = vmatprep.subr.mxu0 0.0
    %255 = vmatpush2.msra.mxu0 0.0
    %256 = vmatprep.subr.mxu0 0.0
    %257 = vmatpush2.msra.mxu0 0.0
    %258 = vmatprep.subr.mxu0 0.0
    %259 = vmatpush2.msra.mxu0 0.0
    %260 = vmatprep.subr.mxu0 0.0
    %261 = vmatpush2.msra.mxu0 0.0
    %262 = vmatprep.mubr.f32.mxu0 0.0
    %263 = vmatmul.mubr.f32.gmra.mxu0 %v174
    %v264 = vpop.f32.mrf.mxu0
    %v265 = vadd.f32 %v196, %v264
    %v266 = vpop.f32.mrf.mxu0
    %267 = vdwg.mxu0
    %v268 = vmax.f32 %v265, 0.0
    %v269 = vld [vmem:[#allocation8] sm:$0xff]
    %v270 = vld [vmem:[#allocation8 + $0x8] sm:$0xff]
    %v271 = vld [vmem:[#allocation8 + $0x10] sm:$0xff]
    %v272 = vld [vmem:[#allocation8 + $0x18] sm:$0xff]
    %v273 = vld [vmem:[#allocation8 + $0x20] sm:$0xff]
    %v274 = vld [vmem:[#allocation8 + $0x28] sm:$0xff]
    %v275 = vld [vmem:[#allocation8 + $0x30] sm:$0xff]
    %v276 = vld [vmem:[#allocation8 + $0x38] sm:$0xff]
    %v277 = vld [vmem:[#allocation8 + $0x40] sm:$0xff]
    %v278 = vld [vmem:[#allocation8 + $0x48] sm:$0xff]
    %v279 = vld [vmem:[#allocation8 + $0x50] sm:$0xff]
    %v280 = vld [vmem:[#allocation8 + $0x58] sm:$0xff]
    %v281 = vld [vmem:[#allocation8 + $0x60] sm:$0xff]
    %v282 = vld [vmem:[#allocation8 + $0x68] sm:$0xff]
    %v283 = vld [vmem:[#allocation8 + $0x70] sm:$0xff]
    %v284 = vld [vmem:[#allocation8 + $0x78] sm:$0xff]
    %v285 = vld [vmem:[%s6] sm:$0x1]
    %v287 = vlaneseq
    %v288 = vshrl.u32 %v287, 7
    %v289 = vsub.s32 0, %v288
    %v290 = vrot.slane %v285, %v289
    %292 = vmatprep.subr.mxu0 0.0
    %293 = vmatpush1.msra.mxu0 %v284
    %294 = vmatprep.subr.mxu0 0.0
    %295 = vmatpush1.msra.mxu0 %v283
    %296 = vmatprep.subr.mxu0 0.0
    %297 = vmatpush1.msra.mxu0 %v282
    %298 = vmatprep.subr.mxu0 0.0
    %299 = vmatpush1.msra.mxu0 %v281
    %300 = vmatprep.subr.mxu0 0.0
    %301 = vmatpush1.msra.mxu0 %v280
    %302 = vmatprep.subr.mxu0 0.0
    %303 = vmatpush1.msra.mxu0 %v279
    %304 = vmatprep.subr.mxu0 0.0
    %305 = vmatpush1.msra.mxu0 %v278
    %306 = vmatprep.subr.mxu0 0.0
    %307 = vmatpush1.msra.mxu0 %v277
    %308 = vmatprep.subr.mxu0 0.0
    %309 = vmatpush1.msra.mxu0 %v276
    %310 = vmatprep.subr.mxu0 0.0
    %311 = vmatpush1.msra.mxu0 %v275
    %312 = vmatprep.subr.mxu0 0.0
    %313 = vmatpush1.msra.mxu0 %v274
    %314 = vmatprep.subr.mxu0 0.0
    %315 = vmatpush1.msra.mxu0 %v273
    %316 = vmatprep.subr.mxu0 0.0
    %317 = vmatpush1.msra.mxu0 %v272
    %318 = vmatprep.subr.mxu0 0.0
    %319 = vmatpush1.msra.mxu0 %v271
    %320 = vmatprep.subr.mxu0 0.0
    %321 = vmatpush1.msra.mxu0 %v270
    %322 = vmatprep.subr.mxu0 0.0
    %323 = vmatpush1.msra.mxu0 %v269
    %324 = vmatprep.subr.mxu0 0.0
    %325 = vmatpush2.msra.mxu0 0.0
    %326 = vmatprep.subr.mxu0 0.0
    %327 = vmatpush2.msra.mxu0 0.0
    %328 = vmatprep.subr.mxu0 0.0
    %329 = vmatpush2.msra.mxu0 0.0
    %330 = vmatprep.subr.mxu0 0.0
    %331 = vmatpush2.msra.mxu0 0.0
    %332 = vmatprep.subr.mxu0 0.0
    %333 = vmatpush2.msra.mxu0 0.0
    %334 = vmatprep.subr.mxu0 0.0
    %335 = vmatpush2.msra.mxu0 0.0
    %336 = vmatprep.subr.mxu0 0.0
    %337 = vmatpush2.msra.mxu0 0.0
    %338 = vmatprep.subr.mxu0 0.0
    %339 = vmatpush2.msra.mxu0 0.0
    %340 = vmatprep.subr.mxu0 0.0
    %341 = vmatpush2.msra.mxu0 0.0
    %342 = vmatprep.subr.mxu0 0.0
    %343 = vmatpush2.msra.mxu0 0.0
    %344 = vmatprep.subr.mxu0 0.0
    %345 = vmatpush2.msra.mxu0 0.0
    %346 = vmatprep.subr.mxu0 0.0
    %347 = vmatpush2.msra.mxu0 0.0
    %348 = vmatprep.subr.mxu0 0.0
    %349 = vmatpush2.msra.mxu0 0.0
    %350 = vmatprep.subr.mxu0 0.0
    %351 = vmatpush2.msra.mxu0 0.0
    %352 = vmatprep.subr.mxu0 0.0
    %353 = vmatpush2.msra.mxu0 0.0
    %354 = vmatprep.subr.mxu0 0.0
    %355 = vmatpush2.msra.mxu0 0.0
    %356 = vmatprep.mubr.f32.mxu0 0.0
    %357 = vmatmul.mubr.f32.gmra.mxu0 %v268
    %v358 = vpop.f32.mrf.mxu0
    %v359 = vadd.f32 %v290, %v358
    %v360 = vpop.f32.mrf.mxu0
    %361 = vdwg.mxu0
    %362 = vst [vmem:[#allocation10] sm:$0xff] %v359
    // Predicated region
    $region46: #{tpu_custom_call.1} parent=1 // pred_check
      _
    $region47: #{tpu_custom_call.1} parent=1 // pred_check_branch
      %364 = sbr.rel (0) target = $region49
    $region48: #{tpu_custom_call.1} parent=1 // pred_region
      %s366 = ssub.s32 128, 128
      %367 = vsyncadd [#allocation4], %s366
      %s369 = sshll.u32 [#allocation10], 4
      %s370 = int_to_ptr.vmem [resolvable:$true] %s369
      %372 = dma.vmem_to_hbm [thread:$0]  %s370, 128, %s7, [#allocation4]
    $region49: #{tpu_custom_call.1} parent=1 // pred_fallthru
      _
    // Predicated region
    $region50: #{tpu_custom_call.1} parent=1 // pred_check
      _
    $region51: #{tpu_custom_call.1} parent=1 // pred_check_branch
      %374 = sbr.rel (0) target = $region53
    $region52: #{tpu_custom_call.1} parent=1 // pred_region
      %375 = dma.done [#allocation4], 128
    $region53: #{tpu_custom_call.1} parent=1 // pred_fallthru
      _
    %376 = vsyncpa [#allocation3], 1
    %377 = vsyncpa [#allocation6], 1
    %378 = vsyncpa [#allocation9], 1
    %379 = vsyncpa [#allocation4], 1

// kernel: tpu_custom_call.1
$region0: #{tpu_custom_call.1}
  #allocation0 [shape = 'u32[]', space=smem, size = 0x4, offset = 0x4, fixed_abs, tag = 'smem constant byte address 0x4 - core index']
  #allocation1 [shape = 'u32[144,128]{1,0:T(1,128)}', space=vmem, size = 0x12000, scoped, tag = 'internal scratch']
  %s0 = inlined_call_operand.hbm [shape: f32[8,128], index: 0, kind: input, shape index: {}]
  %s1 = inlined_call_operand.hbm [shape: f32[128,128], index: 1, kind: input, shape index: {}]
  %s2 = inlined_call_operand.vmem [shape: f32[1,128], index: 2, kind: input, shape index: {}]
  %s3 = inlined_call_operand.hbm [shape: f32[128,128], index: 3, kind: input, shape index: {}]
  %s4 = inlined_call_operand.vmem [shape: f32[1,128], index: 4, kind: input, shape index: {}]
  %s5 = inlined_call_operand.hbm [shape: f32[128,128], index: 5, kind: input, shape index: {}]
  %s6 = inlined_call_operand.vmem [shape: f32[1,128], index: 6, kind: input, shape index: {}]
  %s7 = inlined_call_operand.hbm [shape: f32[8,128], index: 7, kind: output, shape index: {}]
  %s8 = sld [smem:[#allocation0]]
  $region54: #{tpu_custom_call.1} parent=0
    _
  %s10 = ssub.s32 1, %s8
  %s11 = scalar_select 0, %s10, %s8
  $region1: #{tpu_custom_call.1} parent=0
    #allocation2 [shape = 'u8[4096]{0}', space=vmem, size = 0x1000, scoped, tag = 'input window, operand 0, single buffered']
    #allocation3 [shape = 's32[1]{0}', space=sflag, size = 0x4, scoped, tag = 'scoped memory for tpu_custom_call.1']
    #allocation4 [shape = 's32[1]{0}', space=sflag, size = 0x4, scoped, tag = 'scoped memory for tpu_custom_call.1']
    #allocation5 [shape = 'u8[65536]{0}', space=vmem, size = 0x10000, scoped, tag = 'input window, operand 1, single buffered']
    #allocation6 [shape = 's32[1]{0}', space=sflag, size = 0x4, scoped, tag = 'scoped memory for tpu_custom_call.1']
    #allocation7 [shape = 'u8[65536]{0}', space=vmem, size = 0x10000, scoped, tag = 'input window, operand 3, single buffered']
    #allocation8 [shape = 'u8[65536]{0}', space=vmem, size = 0x10000, scoped, tag = 'input window, operand 5, single buffered']
    #allocation9 [shape = 's32[1]{0}', space=sflag, size = 0x4, scoped, tag = 'scoped memory for tpu_custom_call.1']
    #allocation10 [shape = 'u8[4096]{0}', space=vmem, size = 0x1000, scoped, tag = 'output window, operand 0, single buffered']
    %12 = vsyncpa [#allocation3], 0
    %13 = vsyncpa [#allocation6], 0
    %14 = vsyncpa [#allocation9], 0
    %15 = vsyncpa [#allocation4], 0
    // Predicated region
    $region2: #{tpu_custom_call.1} parent=1 // pred_check
      _
    $region3: #{tpu_custom_call.1} parent=1 // pred_check_branch
      %17 = sbr.rel (0) target = $region5
    $region4: #{tpu_custom_call.1} parent=1 // pred_region
      %s19 = ssub.s32 128, 128
      %20 = vsyncadd [#allocation3], %s19
      %s22 = sshll.u32 [#allocation2], 4
      %s23 = int_to_ptr.vmem [resolvable:$true] %s22
      %25 = dma.hbm_to_vmem [thread:$0]  %s0, 128, %s23, [#allocation3]
    $region5: #{tpu_custom_call.1} parent=1 // pred_fallthru
      _
    // Predicated region
    $region6: #{tpu_custom_call.1} parent=1 // pred_check
      _
    $region7: #{tpu_custom_call.1} parent=1 // pred_check_branch
      %27 = sbr.rel (0) target = $region9
    $region8: #{tpu_custom_call.1} parent=1 // pred_region
      %s29 = ssub.s32 2048, 2048
      %30 = vsyncadd [#allocation6], %s29
      %s31 = sshll.u32 [#allocation5], 4
      %s32 = int_to_ptr.vmem [resolvable:$true] %s31
      %37 = dma.hbm_to_vmem [thread:$0]  %s1, 2048, %s32, [#allocation6], 128, 128, 8
    $region9: #{tpu_custom_call.1} parent=1 // pred_fallthru
      _
    // Predicated region
    $region10: #{tpu_custom_call.1} parent=1 // pred_check
      _
    $region11: #{tpu_custom_call.1} parent=1 // pred_check_branch
      %39 = sbr.rel (0) target = $region13
    $region12: #{tpu_custom_call.1} parent=1 // pred_region
      _
    $region13: #{tpu_custom_call.1} parent=1 // pred_fallthru
      _
    // Predicated region
    $region14: #{tpu_custom_call.1} parent=1 // pred_check
      _
    $region15: #{tpu_custom_call.1} parent=1 // pred_check_branch
      %41 = sbr.rel (0) target = $region17
    $region16: #{tpu_custom_call.1} parent=1 // pred_region
      %s43 = ssub.s32 2048, 2048
      %44 = vsyncadd [#allocation6], %s43
      %s45 = sshll.u32 [#allocation7], 4
      %s46 = int_to_ptr.vmem [resolvable:$true] %s45
      %51 = dma.hbm_to_vmem [thread:$0]  %s3, 2048, %s46, [#allocation6], 128, 128, 8
    $region17: #{tpu_custom_call.1} parent=1 // pred_fallthru
      _
    // Predicated region
    $region18: #{tpu_custom_call.1} parent=1 // pred_check
      _
    $region19: #{tpu_custom_call.1} parent=1 // pred_check_branch
      %53 = sbr.rel (0) target = $region21
    $region20: #{tpu_custom_call.1} parent=1 // pred_region
      _
    $region21: #{tpu_custom_call.1} parent=1 // pred_fallthru
      _
    // Predicated region
    $region22: #{tpu_custom_call.1} parent=1 // pred_check
      _
    $region23: #{tpu_custom_call.1} parent=1 // pred_check_branch
      %55 = sbr.rel (0) target = $region25
    $region24: #{tpu_custom_call.1} parent=1 // pred_region
      %s57 = ssub.s32 2048, 2048
      %58 = vsyncadd [#allocation9], %s57
      %s59 = sshll.u32 [#allocation8], 4
      %s60 = int_to_ptr.vmem [resolvable:$true] %s59
      %65 = dma.hbm_to_vmem [thread:$0]  %s5, 2048, %s60, [#allocation9], 128, 128, 8
    $region25: #{tpu_custom_call.1} parent=1 // pred_fallthru
      _
    // Predicated region
    $region26: #{tpu_custom_call.1} parent=1 // pred_check
      _
    $region27: #{tpu_custom_call.1} parent=1 // pred_check_branch
      %67 = sbr.rel (0) target = $region29
    $region28: #{tpu_custom_call.1} parent=1 // pred_region
      _
    $region29: #{tpu_custom_call.1} parent=1 // pred_fallthru
      _
    // Predicated region
    $region30: #{tpu_custom_call.1} parent=1 // pred_check
      _
    $region31: #{tpu_custom_call.1} parent=1 // pred_check_branch
      %69 = sbr.rel (0) target = $region33
    $region32: #{tpu_custom_call.1} parent=1 // pred_region
      %70 = dma.done [#allocation3], 128
    $region33: #{tpu_custom_call.1} parent=1 // pred_fallthru
      _
    // Predicated region
    $region34: #{tpu_custom_call.1} parent=1 // pred_check
      _
    $region35: #{tpu_custom_call.1} parent=1 // pred_check_branch
      %72 = sbr.rel (0) target = $region37
    $region36: #{tpu_custom_call.1} parent=1 // pred_region
      %73 = dma.done [#allocation6], 2048
    $region37: #{tpu_custom_call.1} parent=1 // pred_fallthru
      _
    // Predicated region
    $region38: #{tpu_custom_call.1} parent=1 // pred_check
      _
    $region39: #{tpu_custom_call.1} parent=1 // pred_check_branch
      %75 = sbr.rel (0) target = $region41
    $region40: #{tpu_custom_call.1} parent=1 // pred_region
      %76 = dma.done [#allocation6], 2048
    $region41: #{tpu_custom_call.1} parent=1 // pred_fallthru
      _
    // Predicated region
    $region42: #{tpu_custom_call.1} parent=1 // pred_check
      _
    $region43: #{tpu_custom_call.1} parent=1 // pred_check_branch
      %78 = sbr.rel (0) target = $region45
    $region44: #{tpu_custom_call.1} parent=1 // pred_region
      %79 = dma.done [#allocation9], 2048
    $region45: #{tpu_custom_call.1} parent=1 // pred_fallthru
      _
    %v80 = vld [vmem:[#allocation2] sm:$0xff]
    %v81 = vld [vmem:[#allocation5] sm:$0xff]
    %v82 = vld [vmem:[#allocation5 + $0x8] sm:$0xff]
    %v83 = vld [vmem:[#allocation5 + $0x10] sm:$0xff]
    %v84 = vld [vmem:[#allocation5 + $0x18] sm:$0xff]
    %v85 = vld [vmem:[#allocation5 + $0x20] sm:$0xff]
    %v86 = vld [vmem:[#allocation5 + $0x28] sm:$0xff]
    %v87 = vld [vmem:[#allocation5 + $0x30] sm:$0xff]
    %v88 = vld [vmem:[#allocation5 + $0x38] sm:$0xff]
    %v89 = vld [vmem:[#allocation5 + $0x40] sm:$0xff]
    %v90 = vld [vmem:[#allocation5 + $0x48] sm:$0xff]
    %v91 = vld [vmem:[#allocation5 + $0x50] sm:$0xff]
    %v92 = vld [vmem:[#allocation5 + $0x58] sm:$0xff]
    %v93 = vld [vmem:[#allocation5 + $0x60] sm:$0xff]
    %v94 = vld [vmem:[#allocation5 + $0x68] sm:$0xff]
    %v95 = vld [vmem:[#allocation5 + $0x70] sm:$0xff]
    %v96 = vld [vmem:[#allocation5 + $0x78] sm:$0xff]
    %v97 = vld [vmem:[%s2] sm:$0x1]
    %v99 = vlaneseq
    %v100 = vshrl.u32 %v99, 7
    %v101 = vsub.s32 0, %v100
    %v102 = vrot.slane %v97, %v101
    %104 = vmatprep.subr.mxu0 0.0
    %105 = vmatpush1.msra.mxu0 %v96
    %106 = vmatprep.subr.mxu0 0.0
    %107 = vmatpush1.msra.mxu0 %v95
    %108 = vmatprep.subr.mxu0 0.0
    %109 = vmatpush1.msra.mxu0 %v94
    %110 = vmatprep.subr.mxu0 0.0
    %111 = vmatpush1.msra.mxu0 %v93
    %112 = vmatprep.subr.mxu0 0.0
    %113 = vmatpush1.msra.mxu0 %v92
    %114 = vmatprep.subr.mxu0 0.0
    %115 = vmatpush1.msra.mxu0 %v91
    %116 = vmatprep.subr.mxu0 0.0
    %117 = vmatpush1.msra.mxu0 %v90
    %118 = vmatprep.subr.mxu0 0.0
    %119 = vmatpush1.msra.mxu0 %v89
    %120 = vmatprep.subr.mxu0 0.0
    %121 = vmatpush1.msra.mxu0 %v88
    %122 = vmatprep.subr.mxu0 0.0
    %123 = vmatpush1.msra.mxu0 %v87
    %124 = vmatprep.subr.mxu0 0.0
    %125 = vmatpush1.msra.mxu0 %v86
    %126 = vmatprep.subr.mxu0 0.0
    %127 = vmatpush1.msra.mxu0 %v85
    %128 = vmatprep.subr.mxu0 0.0
    %129 = vmatpush1.msra.mxu0 %v84
    %130 = vmatprep.subr.mxu0 0.0
    %131 = vmatpush1.msra.mxu0 %v83
    %132 = vmatprep.subr.mxu0 0.0
    %133 = vmatpush1.msra.mxu0 %v82
    %134 = vmatprep.subr.mxu0 0.0
    %135 = vmatpush1.msra.mxu0 %v81
    %136 = vmatprep.subr.mxu0 0.0
    %137 = vmatpush2.msra.mxu0 0.0
    %138 = vmatprep.subr.mxu0 0.0
    %139 = vmatpush2.msra.mxu0 0.0
    %140 = vmatprep.subr.mxu0 0.0
    %141 = vmatpush2.msra.mxu0 0.0
    %142 = vmatprep.subr.mxu0 0.0
    %143 = vmatpush2.msra.mxu0 0.0
    %144 = vmatprep.subr.mxu0 0.0
    %145 = vmatpush2.msra.mxu0 0.0
    %146 = vmatprep.subr.mxu0 0.0
    %147 = vmatpush2.msra.mxu0 0.0
    %148 = vmatprep.subr.mxu0 0.0
    %149 = vmatpush2.msra.mxu0 0.0
    %150 = vmatprep.subr.mxu0 0.0
    %151 = vmatpush2.msra.mxu0 0.0
    %152 = vmatprep.subr.mxu0 0.0
    %153 = vmatpush2.msra.mxu0 0.0
    %154 = vmatprep.subr.mxu0 0.0
    %155 = vmatpush2.msra.mxu0 0.0
    %156 = vmatprep.subr.mxu0 0.0
    %157 = vmatpush2.msra.mxu0 0.0
    %158 = vmatprep.subr.mxu0 0.0
    %159 = vmatpush2.msra.mxu0 0.0
    %160 = vmatprep.subr.mxu0 0.0
    %161 = vmatpush2.msra.mxu0 0.0
    %162 = vmatprep.subr.mxu0 0.0
    %163 = vmatpush2.msra.mxu0 0.0
    %164 = vmatprep.subr.mxu0 0.0
    %165 = vmatpush2.msra.mxu0 0.0
    %166 = vmatprep.subr.mxu0 0.0
    %167 = vmatpush2.msra.mxu0 0.0
    %168 = vmatprep.mubr.f32.mxu0 0.0
    %169 = vmatmul.mubr.f32.gmra.mxu0 %v80
    %v170 = vpop.f32.mrf.mxu0
    %v171 = vadd.f32 %v102, %v170
    %v172 = vpop.f32.mrf.mxu0
    %173 = vdwg.mxu0
    %v174 = vmax.f32 %v171, 0.0
    %v175 = vld [vmem:[#allocation7] sm:$0xff]
    %v176 = vld [vmem:[#allocation7 + $0x8] sm:$0xff]
    %v177 = vld [vmem:[#allocation7 + $0x10] sm:$0xff]
    %v178 = vld [vmem:[#allocation7 + $0x18] sm:$0xff]
    %v179 = vld [vmem:[#allocation7 + $0x20] sm:$0xff]
    %v180 = vld [vmem:[#allocation7 + $0x28] sm:$0xff]
    %v181 = vld [vmem:[#allocation7 + $0x30] sm:$0xff]
    %v182 = vld [vmem:[#allocation7 + $0x38] sm:$0xff]
    %v183 = vld [vmem:[#allocation7 + $0x40] sm:$0xff]
    %v184 = vld [vmem:[#allocation7 + $0x48] sm:$0xff]
    %v185 = vld [vmem:[#allocation7 + $0x50] sm:$0xff]
    %v186 = vld [vmem:[#allocation7 + $0x58] sm:$0xff]
    %v187 = vld [vmem:[#allocation7 + $0x60] sm:$0xff]
    %v188 = vld [vmem:[#allocation7 + $0x68] sm:$0xff]
    %v189 = vld [vmem:[#allocation7 + $0x70] sm:$0xff]
    %v190 = vld [vmem:[#allocation7 + $0x78] sm:$0xff]
    %v191 = vld [vmem:[%s4] sm:$0x1]
    %v193 = vlaneseq
    %v194 = vshrl.u32 %v193, 7
    %v195 = vsub.s32 0, %v194
    %v196 = vrot.slane %v191, %v195
    %198 = vmatprep.subr.mxu0 0.0
    %199 = vmatpush1.msra.mxu0 %v190
    %200 = vmatprep.subr.mxu0 0.0
    %201 = vmatpush1.msra.mxu0 %v189
    %202 = vmatprep.subr.mxu0 0.0
    %203 = vmatpush1.msra.mxu0 %v188
    %204 = vmatprep.subr.mxu0 0.0
    %205 = vmatpush1.msra.mxu0 %v187
    %206 = vmatprep.subr.mxu0 0.0
    %207 = vmatpush1.msra.mxu0 %v186
    %208 = vmatprep.subr.mxu0 0.0
    %209 = vmatpush1.msra.mxu0 %v185
    %210 = vmatprep.subr.mxu0 0.0
    %211 = vmatpush1.msra.mxu0 %v184
    %212 = vmatprep.subr.mxu0 0.0
    %213 = vmatpush1.msra.mxu0 %v183
    %214 = vmatprep.subr.mxu0 0.0
    %215 = vmatpush1.msra.mxu0 %v182
    %216 = vmatprep.subr.mxu0 0.0
    %217 = vmatpush1.msra.mxu0 %v181
    %218 = vmatprep.subr.mxu0 0.0
    %219 = vmatpush1.msra.mxu0 %v180
    %220 = vmatprep.subr.mxu0 0.0
    %221 = vmatpush1.msra.mxu0 %v179
    %222 = vmatprep.subr.mxu0 0.0
    %223 = vmatpush1.msra.mxu0 %v178
    %224 = vmatprep.subr.mxu0 0.0
    %225 = vmatpush1.msra.mxu0 %v177
    %226 = vmatprep.subr.mxu0 0.0
    %227 = vmatpush1.msra.mxu0 %v176
    %228 = vmatprep.subr.mxu0 0.0
    %229 = vmatpush1.msra.mxu0 %v175
    %230 = vmatprep.subr.mxu0 0.0
    %231 = vmatpush2.msra.mxu0 0.0
    %232 = vmatprep.subr.mxu0 0.0
    %233 = vmatpush2.msra.mxu0 0.0
    %234 = vmatprep.subr.mxu0 0.0
    %235 = vmatpush2.msra.mxu0 0.0
    %236 = vmatprep.subr.mxu0 0.0
    %237 = vmatpush2.msra.mxu0 0.0
    %238 = vmatprep.subr.mxu0 0.0
    %239 = vmatpush2.msra.mxu0 0.0
    %240 = vmatprep.subr.mxu0 0.0
    %241 = vmatpush2.msra.mxu0 0.0
    %242 = vmatprep.subr.mxu0 0.0
    %243 = vmatpush2.msra.mxu0 0.0
    %244 = vmatprep.subr.mxu0 0.0
    %245 = vmatpush2.msra.mxu0 0.0
    %246 = vmatprep.subr.mxu0 0.0
    %247 = vmatpush2.msra.mxu0 0.0
    %248 = vmatprep.subr.mxu0 0.0
    %249 = vmatpush2.msra.mxu0 0.0
    %250 = vmatprep.subr.mxu0 0.0
    %251 = vmatpush2.msra.mxu0 0.0
    %252 = vmatprep.subr.mxu0 0.0
    %253 = vmatpush2.msra.mxu0 0.0
    %254 = vmatprep.subr.mxu0 0.0
    %255 = vmatpush2.msra.mxu0 0.0
    %256 = vmatprep.subr.mxu0 0.0
    %257 = vmatpush2.msra.mxu0 0.0
    %258 = vmatprep.subr.mxu0 0.0
    %259 = vmatpush2.msra.mxu0 0.0
    %260 = vmatprep.subr.mxu0 0.0
    %261 = vmatpush2.msra.mxu0 0.0
    %262 = vmatprep.mubr.f32.mxu0 0.0
    %263 = vmatmul.mubr.f32.gmra.mxu0 %v174
    %v264 = vpop.f32.mrf.mxu0
    %v265 = vadd.f32 %v196, %v264
    %v266 = vpop.f32.mrf.mxu0
    %267 = vdwg.mxu0
    %v268 = vmax.f32 %v265, 0.0
    %v269 = vld [vmem:[#allocation8] sm:$0xff]
    %v270 = vld [vmem:[#allocation8 + $0x8] sm:$0xff]
    %v271 = vld [vmem:[#allocation8 + $0x10] sm:$0xff]
    %v272 = vld [vmem:[#allocation8 + $0x18] sm:$0xff]
    %v273 = vld [vmem:[#allocation8 + $0x20] sm:$0xff]
    %v274 = vld [vmem:[#allocation8 + $0x28] sm:$0xff]
    %v275 = vld [vmem:[#allocation8 + $0x30] sm:$0xff]
    %v276 = vld [vmem:[#allocation8 + $0x38] sm:$0xff]
    %v277 = vld [vmem:[#allocation8 + $0x40] sm:$0xff]
    %v278 = vld [vmem:[#allocation8 + $0x48] sm:$0xff]
    %v279 = vld [vmem:[#allocation8 + $0x50] sm:$0xff]
    %v280 = vld [vmem:[#allocation8 + $0x58] sm:$0xff]
    %v281 = vld [vmem:[#allocation8 + $0x60] sm:$0xff]
    %v282 = vld [vmem:[#allocation8 + $0x68] sm:$0xff]
    %v283 = vld [vmem:[#allocation8 + $0x70] sm:$0xff]
    %v284 = vld [vmem:[#allocation8 + $0x78] sm:$0xff]
    %v285 = vld [vmem:[%s6] sm:$0x1]
    %v287 = vlaneseq
    %v288 = vshrl.u32 %v287, 7
    %v289 = vsub.s32 0, %v288
    %v290 = vrot.slane %v285, %v289
    %292 = vmatprep.subr.mxu0 0.0
    %293 = vmatpush1.msra.mxu0 %v284
    %294 = vmatprep.subr.mxu0 0.0
    %295 = vmatpush1.msra.mxu0 %v283
    %296 = vmatprep.subr.mxu0 0.0
    %297 = vmatpush1.msra.mxu0 %v282
    %298 = vmatprep.subr.mxu0 0.0
    %299 = vmatpush1.msra.mxu0 %v281
    %300 = vmatprep.subr.mxu0 0.0
    %301 = vmatpush1.msra.mxu0 %v280
    %302 = vmatprep.subr.mxu0 0.0
    %303 = vmatpush1.msra.mxu0 %v279
    %304 = vmatprep.subr.mxu0 0.0
    %305 = vmatpush1.msra.mxu0 %v278
    %306 = vmatprep.subr.mxu0 0.0
    %307 = vmatpush1.msra.mxu0 %v277
    %308 = vmatprep.subr.mxu0 0.0
    %309 = vmatpush1.msra.mxu0 %v276
    %310 = vmatprep.subr.mxu0 0.0
    %311 = vmatpush1.msra.mxu0 %v275
    %312 = vmatprep.subr.mxu0 0.0
    %313 = vmatpush1.msra.mxu0 %v274
    %314 = vmatprep.subr.mxu0 0.0
    %315 = vmatpush1.msra.mxu0 %v273
    %316 = vmatprep.subr.mxu0 0.0
    %317 = vmatpush1.msra.mxu0 %v272
    %318 = vmatprep.subr.mxu0 0.0
    %319 = vmatpush1.msra.mxu0 %v271
    %320 = vmatprep.subr.mxu0 0.0
    %321 = vmatpush1.msra.mxu0 %v270
    %322 = vmatprep.subr.mxu0 0.0
    %323 = vmatpush1.msra.mxu0 %v269
    %324 = vmatprep.subr.mxu0 0.0
    %325 = vmatpush2.msra.mxu0 0.0
    %326 = vmatprep.subr.mxu0 0.0
    %327 = vmatpush2.msra.mxu0 0.0
    %328 = vmatprep.subr.mxu0 0.0
    %329 = vmatpush2.msra.mxu0 0.0
    %330 = vmatprep.subr.mxu0 0.0
    %331 = vmatpush2.msra.mxu0 0.0
    %332 = vmatprep.subr.mxu0 0.0
    %333 = vmatpush2.msra.mxu0 0.0
    %334 = vmatprep.subr.mxu0 0.0
    %335 = vmatpush2.msra.mxu0 0.0
    %336 = vmatprep.subr.mxu0 0.0
    %337 = vmatpush2.msra.mxu0 0.0
    %338 = vmatprep.subr.mxu0 0.0
    %339 = vmatpush2.msra.mxu0 0.0
    %340 = vmatprep.subr.mxu0 0.0
    %341 = vmatpush2.msra.mxu0 0.0
    %342 = vmatprep.subr.mxu0 0.0
    %343 = vmatpush2.msra.mxu0 0.0
    %344 = vmatprep.subr.mxu0 0.0
    %345 = vmatpush2.msra.mxu0 0.0
    %346 = vmatprep.subr.mxu0 0.0
    %347 = vmatpush2.msra.mxu0 0.0
    %348 = vmatprep.subr.mxu0 0.0
    %349 = vmatpush2.msra.mxu0 0.0
    %350 = vmatprep.subr.mxu0 0.0
    %351 = vmatpush2.msra.mxu0 0.0
    %352 = vmatprep.subr.mxu0 0.0
    %353 = vmatpush2.msra.mxu0 0.0
    %354 = vmatprep.subr.mxu0 0.0
    %355 = vmatpush2.msra.mxu0 0.0
    %356 = vmatprep.mubr.f32.mxu0 0.0
    %357 = vmatmul.mubr.f32.gmra.mxu0 %v268
    %v358 = vpop.f32.mrf.mxu0
    %v359 = vadd.f32 %v290, %v358
    %v360 = vpop.f32.mrf.mxu0
    %361 = vdwg.mxu0
    %362 = vst [vmem:[#allocation10] sm:$0xff] %v359
    // Predicated region
    $region46: #{tpu_custom_call.1} parent=1 // pred_check
      _
    $region47: #{tpu_custom_call.1} parent=1 // pred_check_branch
      %364 = sbr.rel (0) target = $region49
    $region48: #{tpu_custom_call.1} parent=1 // pred_region
      %s366 = ssub.s32 128, 128
      %367 = vsyncadd [#allocation4], %s366
      %s369 = sshll.u32 [#allocation10], 4
      %s370 = int_to_ptr.vmem [resolvable:$true] %s369
      %372 = dma.vmem_to_hbm [thread:$0]  %s370, 128, %s7, [#allocation4]
    $region49: #{tpu_custom_call.1} parent=1 // pred_fallthru
      _
    // Predicated region
    $region50: #{tpu_custom_call.1} parent=1 // pred_check
      _
    $region51: #{tpu_custom_call.1} parent=1 // pred_check_branch
      %374 = sbr.rel (0) target = $region53
    $region52: #{tpu_custom_call.1} parent=1 // pred_region
      %375 = dma.done [#allocation4], 128
    $region53: #{tpu_custom_call.1} parent=1 // pred_fallthru
      _
    %376 = vsyncpa [#allocation3], 1
    %377 = vsyncpa [#allocation6], 1
    %378 = vsyncpa [#allocation9], 1
    %379 = vsyncpa [#allocation4], 1

</llo_original>
